<compile_context>
chip_gen: v7x
topology: tpu7x:2x2x1
jax: 0.10.0
libtpu: 0.0.40
codegen_flags: <defaults>
</compile_context>

<pallas_src>
import jax
import jax.numpy as jnp
from jax.experimental import pallas as pl
from jax.experimental.pallas import tpu as pltpu

_LANE = 128  # lane (last-dim) alignment for dh reduction tiles


def _round_up(x, m):
    return ((x + m - 1) // m) * m


def _mlp_kernel(x_ref, w1_ref, b1_ref, w2_ref, b2_ref, o_ref, acc_ref):
    k = pl.program_id(1)  # dim_hidden reduction axis (last, "arbitrary")

    @pl.when(k == 0)
    def _():
        acc_ref[...] = jnp.zeros_like(acc_ref)

    # hidden slab for this dh tile: relu(x @ W1[:, k] + b1[k]); f32 acc on MXU
    h = jnp.dot(x_ref[...], w1_ref[...], preferred_element_type=jnp.float32)
    h = jnp.maximum(h + b1_ref[...], 0.0)          # bias + ReLU on the VPU (f32)
    # partial output contribution: h @ W2[k, :]
    acc_ref[...] += jnp.dot(h.astype(w2_ref.dtype), w2_ref[...],
                            preferred_element_type=jnp.float32)

    @pl.when(k == pl.num_programs(1) - 1)
    def _():
        o_ref[...] = (acc_ref[...] + b2_ref[...]).astype(o_ref.dtype)


def _vmem_limit_bytes():
    # Generation-aware: ~75% of physical VMEM, capped at 100 MiB
    # (v5e/v6e: 128 MiB phys -> ~96 MiB; v7x: 64 MiB phys -> 48 MiB).
    try:
        cap = pltpu.get_tpu_info().vmem_capacity_bytes
        return min(int(cap * 3 // 4), 100 * 1024 * 1024)
    except Exception:
        return 48 * 1024 * 1024  # safe on every generation


def mlp_1hl_forward(x, w1, b1, w2, b2, *, tile_b_max=512, dh_tile_max=512,
                    compute_dtype=jnp.bfloat16):
    """x: (B, dim_in); w1: (dim_in, dim_hidden); b1: (dim_hidden,);
       w2: (dim_hidden, dim_out); b2: (dim_out,).  Returns (B, dim_out) in
       x.dtype.  compute_dtype sets the MXU input dtype (default bf16);
       accumulation is always f32."""
    B, dim_in = x.shape
    dim_hidden = w1.shape[1]
    dim_out = w2.shape[1]

    cdt = jax.dtypes.canonicalize_dtype(
        compute_dtype if compute_dtype is not None else x.dtype)
    sub = 8 * max(1, 4 // cdt.itemsize)  # sublane packing: f32->8, bf16->16

    # Batch tiling: guarantee >=2 tiles when the batch allows it so the
    # "parallel" batch axis shards across both v7x TensorCores.
    tile_b = min(tile_b_max, max(sub, _round_up(pl.cdiv(B, 2), sub)))
    b_pad = _round_up(B, tile_b)

    # dim_hidden reduction tiling: full-width block when small (no padding),
    # 128-multiple tiles when large so W1/W2 stream through VMEM.
    if dim_hidden <= dh_tile_max:
        dh_blk = dh_p = dim_hidden
    else:
        dh_blk = _round_up(dh_tile_max, _LANE)
        dh_p = _round_up(dim_hidden, dh_blk)
    # TODO(synk): dim_in is not tiled; one (tile_b, dim_in) x-slab plus a
    # (dim_in, dh_blk) W1 block must fit VMEM (fine for MLP-sized dim_in).

    def prep(a, row_pad, col_pad, dtype):
        if row_pad or col_pad:
            a = jnp.pad(a, ((0, row_pad), (0, col_pad)))  # zero pad is exact
        return a.astype(dtype) if a.dtype != dtype else a

    # dim_in / dim_out stay unpadded (block dim == full array dim is legal).
    x_p = prep(x, b_pad - B, 0, cdt)
    w1_p = prep(w1, 0, dh_p - dim_hidden, cdt)
    w2_p = prep(w2, dh_p - dim_hidden, 0, cdt)
    b1_p = prep(b1.reshape(1, dim_hidden), 0, dh_p - dim_hidden, jnp.float32)
    b2_p = prep(b2.reshape(1, dim_out), 0, 0, jnp.float32)

    grid = (b_pad // tile_b, dh_p // dh_blk)

    out_itemsize = jax.dtypes.canonicalize_dtype(x.dtype).itemsize
    cost = pl.CostEstimate(
        flops=2 * b_pad * (dim_in * dh_p + dh_p * dim_out),
        transcendentals=0,
        bytes_accessed=(x_p.size * x_p.dtype.itemsize
                        + w1_p.size * w1_p.dtype.itemsize
                        + w2_p.size * w2_p.dtype.itemsize
                        + b1_p.size * 4 + b2_p.size * 4
                        + b_pad * dim_out * out_itemsize))

    out_p = pl.pallas_call(
        _mlp_kernel,
        out_shape=jax.ShapeDtypeStruct((b_pad, dim_out), x.dtype),
        grid_spec=pltpu.PrefetchScalarGridSpec(
            num_scalar_prefetch=0,
            grid=grid,
            in_specs=[
                # x: tiled along batch, constant across the dh axis.
                pl.BlockSpec((tile_b, dim_in), lambda i, k: (i, 0)),
                # W1 / b1: streamed along the dh reduction axis.
                pl.BlockSpec((dim_in, dh_blk), lambda i, k: (0, k)),
                pl.BlockSpec((1, dh_blk), lambda i, k: (0, k)),
                # W2: streamed along dh; b2: single resident block.
                pl.BlockSpec((dh_blk, dim_out), lambda i, k: (k, 0)),
                pl.BlockSpec((1, dim_out), lambda i, k: (0, 0)),
            ],
            out_specs=pl.BlockSpec((tile_b, dim_out), lambda i, k: (i, 0)),
            scratch_shapes=[pltpu.VMEM((tile_b, dim_out), jnp.float32)],
        ),
        compiler_params=pltpu.CompilerParams(
            dimension_semantics=("parallel", "arbitrary"),
            vmem_limit_bytes=_vmem_limit_bytes(),
        ),
        cost_estimate=cost,
    )(x_p, w1_p, b1_p, w2_p, b2_p)

    # Only the padded batch rows (if any) need slicing off; columns are exact.
    return out_p if b_pad == B else out_p[:B]


if __name__ == "__main__":
    key = jax.random.PRNGKey(0)
    kx, kw1, kb1, kw2, kb2, kx2 = jax.random.split(key, 6)

    def ref_fn(x, w1, b1, w2, b2):
        h = jnp.maximum(jnp.dot(x, w1, preferred_element_type=jnp.float32) + b1, 0.0)
        return jnp.dot(h, w2, preferred_element_type=jnp.float32) + b2

    # ---- 1) Small module-like shapes, f32 compute path, tight check ----
    batch, dim_in, dim_hidden, dim_out = 8, 16, 32, 8
    x = jax.random.normal(kx, (batch, dim_in), dtype=jnp.float32)
    # nn.Linear params (W: (out,in), b: (out,)) stored pre-transposed as (in,out).
    w1 = jax.random.normal(kw1, (dim_in, dim_hidden), dtype=jnp.float32) * 0.1
    b1 = jax.random.normal(kb1, (dim_hidden,), dtype=jnp.float32) * 0.1
    w2 = jax.random.normal(kw2, (dim_hidden, dim_out), dtype=jnp.float32) * 0.1
    b2 = jax.random.normal(kb2, (dim_out,), dtype=jnp.float32) * 0.1

    ref = ref_fn(x, w1, b1, w2, b2)
    out_f32 = jax.block_until_ready(
        mlp_1hl_forward(x, w1, b1, w2, b2, compute_dtype=jnp.float32))
    assert out_f32.shape == (batch, dim_out)
    assert jnp.allclose(out_f32, ref, atol=1e-5, rtol=1e-5)

    # ---- 2) Default bf16 MXU inputs (f32 accumulation): looser tolerance ----
    out_bf16 = jax.block_until_ready(mlp_1hl_forward(x, w1, b1, w2, b2))
    assert out_bf16.shape == (batch, dim_out)
    assert jnp.allclose(out_bf16, ref, atol=2e-2, rtol=2e-2)

    # ---- 3) Non-aligned batch + dh-tiled reduction: grid=(3, 2) ----
    B2, din2, dh2, dout2 = 300, 64, 256, 96
    x2 = jax.random.normal(kx2, (B2, din2), dtype=jnp.float32)
    w1b = jax.random.normal(kw1, (din2, dh2), dtype=jnp.float32) * 0.05
    b1b = jax.random.normal(kb1, (dh2,), dtype=jnp.float32) * 0.05
    w2b = jax.random.normal(kw2, (dh2, dout2), dtype=jnp.float32) * 0.05
    b2b = jax.random.normal(kb2, (dout2,), dtype=jnp.float32) * 0.05
    ref2 = ref_fn(x2, w1b, b1b, w2b, b2b)
    out2 = jax.block_until_ready(
        mlp_1hl_forward(x2, w1b, b1b, w2b, b2b,
                        tile_b_max=128, dh_tile_max=128,
                        compute_dtype=jnp.float32))
    assert out2.shape == (B2, dout2)
    assert jnp.allclose(out2, ref2, atol=1e-3, rtol=1e-3)

    print("KERNEL_OK")
</pallas_src>

<mosaic_0001>
module attributes {stable_mosaic.version = 11 : i64} {
  func.func @_mlp_kernel(%arg0: i32, %arg1: i32, %arg2: memref<8x16xf32, #tpu.memory_space<vmem>>, %arg3: memref<16x32xf32, #tpu.memory_space<vmem>>, %arg4: memref<1x32xf32, #tpu.memory_space<vmem>>, %arg5: memref<32x8xf32, #tpu.memory_space<vmem>>, %arg6: memref<1x8xf32, #tpu.memory_space<vmem>>, %arg7: memref<8x8xf32, #tpu.memory_space<vmem>>, %arg8: memref<8x8xf32, #tpu.memory_space<vmem>>) attributes {dimension_semantics = [#tpu.dimension_semantics<parallel>, #tpu.dimension_semantics<arbitrary>], iteration_bounds = array<i64: 1, 1>, scalar_prefetch = 0 : i64, scratch_operands = 1 : i64, tpu.core_type = #tpu.core_type<tc>, window_params = [{transform_indices = @transform_0, window_bounds = array<i64: 8, 16>}, {transform_indices = @transform_1, window_bounds = array<i64: 16, 32>}, {transform_indices = @transform_2, window_bounds = array<i64: 1, 32>}, {transform_indices = @transform_3, window_bounds = array<i64: 32, 8>}, {pipeline_mode = #tpu.pipeline_mode<synchronous>, transform_indices = @transform_4, window_bounds = array<i64: 1, 8>}, {transform_indices = @transform_5, window_bounds = array<i64: 8, 8>}]} {
    %c0_i32 = arith.constant 0 : i32
    %0 = arith.cmpi eq, %arg1, %c0_i32 : i32
    %1 = arith.extui %0 : i1 to i32
    %c0_i32_0 = arith.constant 0 : i32
    %2 = arith.cmpi ne, %1, %c0_i32_0 : i32
    scf.if %2 {
      %cst_16 = arith.constant 0.000000e+00 : f32
      %19 = vector.broadcast %cst_16 : f32 to vector<8x8xf32>
      %c0_17 = arith.constant 0 : index
      %c0_18 = arith.constant 0 : index
      %20 = vector.load %arg8[%c0_17, %c0_18] : memref<8x8xf32, #tpu.memory_space<vmem>>, vector<8x8xf32>
      tpu.vector_store %arg8[%c0_17, %c0_18], %19 {strides = array<i32>} : memref<8x8xf32, #tpu.memory_space<vmem>>, vector<8x8xf32>,
    } else {
    }
    %c0 = arith.constant 0 : index
    %c0_1 = arith.constant 0 : index
    %3 = vector.load %arg2[%c0, %c0_1] : memref<8x16xf32, #tpu.memory_space<vmem>>, vector<8x16xf32>
    %c0_2 = arith.constant 0 : index
    %c0_3 = arith.constant 0 : index
    %4 = vector.load %arg3[%c0_2, %c0_3] : memref<16x32xf32, #tpu.memory_space<vmem>>, vector<16x32xf32>
    %cst = arith.constant dense<0.000000e+00> : vector<8x32xf32>
    %5 = tpu.matmul %3, %4, %cst {dimension_numbers = #tpu.dot_dimension_numbers<[1], [0], [0], [1], [0, 0, 1, 1], [], []>} : vector<8x16xf32>, vector<16x32xf32>, vector<8x32xf32> -> vector<8x32xf32>
    %c0_4 = arith.constant 0 : index
    %c0_5 = arith.constant 0 : index
    %6 = vector.load %arg4[%c0_4, %c0_5] : memref<1x32xf32, #tpu.memory_space<vmem>>, vector<1x32xf32>
    %7 = vector.broadcast %6 : vector<1x32xf32> to vector<8x32xf32>
    %8 = arith.addf %5, %7 : vector<8x32xf32>
    %cst_6 = arith.constant 0.000000e+00 : f32
    %9 = vector.broadcast %cst_6 : f32 to vector<8x32xf32>
    %10 = arith.maximumf %8, %9 : vector<8x32xf32>
    %c0_7 = arith.constant 0 : index
    %c0_8 = arith.constant 0 : index
    %11 = vector.load %arg8[%c0_7, %c0_8] : memref<8x8xf32, #tpu.memory_space<vmem>>, vector<8x8xf32>
    %c0_9 = arith.constant 0 : index
    %c0_10 = arith.constant 0 : index
    %12 = vector.load %arg5[%c0_9, %c0_10] : memref<32x8xf32, #tpu.memory_space<vmem>>, vector<32x8xf32>
    %cst_11 = arith.constant dense<0.000000e+00> : vector<8x8xf32>
    %13 = tpu.matmul %10, %12, %cst_11 {dimension_numbers = #tpu.dot_dimension_numbers<[1], [0], [0], [1], [0, 0, 1, 1], [], []>} : vector<8x32xf32>, vector<32x8xf32>, vector<8x8xf32> -> vector<8x8xf32>
    %14 = arith.addf %11, %13 : vector<8x8xf32>
    %c0_12 = arith.constant 0 : index
    %c0_13 = arith.constant 0 : index
    %15 = vector.load %arg8[%c0_12, %c0_13] : memref<8x8xf32, #tpu.memory_space<vmem>>, vector<8x8xf32>
    tpu.vector_store %arg8[%c0_12, %c0_13], %14 {strides = array<i32>} : memref<8x8xf32, #tpu.memory_space<vmem>>, vector<8x8xf32>,
    %c0_i32_14 = arith.constant 0 : i32
    %16 = arith.cmpi eq, %arg1, %c0_i32_14 : i32
    %17 = arith.extui %16 : i1 to i32
    %c0_i32_15 = arith.constant 0 : i32
    %18 = arith.cmpi ne, %17, %c0_i32_15 : i32
    scf.if %18 {
      %c0_16 = arith.constant 0 : index
      %c0_17 = arith.constant 0 : index
      %19 = vector.load %arg8[%c0_16, %c0_17] : memref<8x8xf32, #tpu.memory_space<vmem>>, vector<8x8xf32>
      %c0_18 = arith.constant 0 : index
      %c0_19 = arith.constant 0 : index
      %20 = vector.load %arg6[%c0_18, %c0_19] : memref<1x8xf32, #tpu.memory_space<vmem>>, vector<1x8xf32>
      %21 = vector.broadcast %20 : vector<1x8xf32> to vector<8x8xf32>
      %22 = arith.addf %19, %21 : vector<8x8xf32>
      %c0_20 = arith.constant 0 : index
      %c0_21 = arith.constant 0 : index
      %23 = vector.load %arg7[%c0_20, %c0_21] : memref<8x8xf32, #tpu.memory_space<vmem>>, vector<8x8xf32>
      tpu.vector_store %arg7[%c0_20, %c0_21], %22 {strides = array<i32>} : memref<8x8xf32, #tpu.memory_space<vmem>>, vector<8x8xf32>,
    } else {
    }
    return
  }
  func.func @transform_0(%arg0: i32, %arg1: i32) -> (i32, i32) {
    %c0_i32 = arith.constant 0 : i32
    %c0_i32_0 = arith.constant 0 : i32
    return %arg0, %c0_i32 : i32, i32
  }
  func.func @transform_1(%arg0: i32, %arg1: i32) -> (i32, i32) {
    %c0_i32 = arith.constant 0 : i32
    %c0_i32_0 = arith.constant 0 : i32
    return %c0_i32, %arg1 : i32, i32
  }
  func.func @transform_2(%arg0: i32, %arg1: i32) -> (i32, i32) {
    %c0_i32 = arith.constant 0 : i32
    %c0_i32_0 = arith.constant 0 : i32
    return %c0_i32, %arg1 : i32, i32
  }
  func.func @transform_3(%arg0: i32, %arg1: i32) -> (i32, i32) {
    %c0_i32 = arith.constant 0 : i32
    %c0_i32_0 = arith.constant 0 : i32
    return %arg1, %c0_i32 : i32, i32
  }
  func.func @transform_4(%arg0: i32, %arg1: i32) -> (i32, i32) {
    %c0_i32 = arith.constant 0 : i32
    %c0_i32_0 = arith.constant 0 : i32
    %c0_i32_1 = arith.constant 0 : i32
    return %c0_i32, %c0_i32_0 : i32, i32
  }
  func.func @transform_5(%arg0: i32, %arg1: i32) -> (i32, i32) {
    %c0_i32 = arith.constant 0 : i32
    %c0_i32_0 = arith.constant 0 : i32
    return %arg0, %c0_i32 : i32, i32
  }
}

</mosaic_0001>

<llo_original>
// kernel: tpu_custom_call.1
$region0: #{tpu_custom_call.1}
  #allocation0 [shape = 'u32[]', space=smem, size = 0x4, offset = 0x4, fixed_abs, tag = 'smem constant byte address 0x4 - core index']
  #allocation1 [shape = 'u32[144,128]{1,0:T(1,128)}', space=vmem, size = 0x12000, scoped, tag = 'internal scratch']
  #allocation2 [shape = 'f32[8,8]{1,0:T(8,128)}', space=vmem, size = 0x1000, scoped, tag = 'scratch operand']
  %s0 = inlined_call_operand.vmem [shape: f32[8,16], index: 0, kind: input, shape index: {}]
  %s1 = inlined_call_operand.vmem [shape: f32[16,32], index: 1, kind: input, shape index: {}]
  %s2 = inlined_call_operand.vmem [shape: f32[1,32], index: 2, kind: input, shape index: {}]
  %s3 = inlined_call_operand.vmem [shape: f32[32,8], index: 3, kind: input, shape index: {}]
  %s4 = inlined_call_operand.vmem [shape: f32[1,8], index: 4, kind: input, shape index: {}]
  %s5 = inlined_call_operand.hbm [shape: f32[8,8], index: 5, kind: output, shape index: {}]
  %s6 = sld [smem:[#allocation0]]
  $region38: #{tpu_custom_call.1} parent=0
    _
  %s8 = ssub.s32 1, %s6
  %s9 = scalar_select 0, %s8, %s6
  $region1: #{tpu_custom_call.1} parent=0
    #allocation3 [shape = 'u8[4096]{0}', space=vmem, size = 0x1000, scoped, tag = 'output window, operand 0, single buffered']
    #allocation4 [shape = 's32[1]{0}', space=sflag, size = 0x4, scoped, tag = 'scoped memory for tpu_custom_call.1']
    %10 = vsyncpa [#allocation4], 0
    // Predicated region
    $region2: #{tpu_custom_call.1} parent=1 // pred_check
      _
    $region3: #{tpu_custom_call.1} parent=1 // pred_check_branch
      %12 = sbr.rel (0) target = $region5
    $region4: #{tpu_custom_call.1} parent=1 // pred_region
      _
    $region5: #{tpu_custom_call.1} parent=1 // pred_fallthru
      _
    // Predicated region
    $region6: #{tpu_custom_call.1} parent=1 // pred_check
      _
    $region7: #{tpu_custom_call.1} parent=1 // pred_check_branch
      %14 = sbr.rel (0) target = $region9
    $region8: #{tpu_custom_call.1} parent=1 // pred_region
      _
    $region9: #{tpu_custom_call.1} parent=1 // pred_fallthru
      _
    // Predicated region
    $region10: #{tpu_custom_call.1} parent=1 // pred_check
      _
    $region11: #{tpu_custom_call.1} parent=1 // pred_check_branch
      %16 = sbr.rel (0) target = $region13
    $region12: #{tpu_custom_call.1} parent=1 // pred_region
      _
    $region13: #{tpu_custom_call.1} parent=1 // pred_fallthru
      _
    // Predicated region
    $region14: #{tpu_custom_call.1} parent=1 // pred_check
      _
    $region15: #{tpu_custom_call.1} parent=1 // pred_check_branch
      %18 = sbr.rel (0) target = $region17
    $region16: #{tpu_custom_call.1} parent=1 // pred_region
      _
    $region17: #{tpu_custom_call.1} parent=1 // pred_fallthru
      _
    // Predicated region
    $region18: #{tpu_custom_call.1} parent=1 // pred_check
      _
    $region19: #{tpu_custom_call.1} parent=1 // pred_check_branch
      %20 = sbr.rel (0) target = $region21
    $region20: #{tpu_custom_call.1} parent=1 // pred_region
      _
    $region21: #{tpu_custom_call.1} parent=1 // pred_fallthru
      _
    %p21 = scmp.eq.s32.totalorder 0, 0
    // Predicated region
    $region22: #{tpu_custom_call.1} parent=1 // pred_check
      %p22 = pneg %p21
    $region23: #{tpu_custom_call.1} parent=1 // pred_check_branch
      %24 = sbr.rel (%p22) target = $region25
    $region24: #{tpu_custom_call.1} parent=1 // pred_region
      %vm25 = vcmask 64512
      %26 = vst.msk [vmem:[#allocation2] sm:$0xff] %vm25, 0.0
    $region25: #{tpu_custom_call.1} parent=1 // pred_fallthru
      _
    %v27 = vld [vmem:[%s0] sm:$0xff]
    %v28 = vld [vmem:[%s1] sm:$0xff]
    %v29 = vld [vmem:[%s1 + $0x8] sm:$0xff]
    %v30 = vld [vmem:[%s2] sm:$0x1]
    %v32 = vlaneseq
    %v33 = vshrl.u32 %v32, 7
    %v34 = vsub.s32 0, %v33
    %v35 = vrot.slane %v30, %v34
    %vm37 = vcmask 130048
    %v39 = vsel %vm37, %v27, 0
    %41 = vmatprep.subr.mxu0 0.0
    %42 = vmatpush1.msra.mxu0 %v28
    %43 = vmatprep.subr.mxu0 0.0
    %44 = vmatpush1.msra.mxu0 %v29
    %45 = vmatprep.subr.mxu0 0.0
    %46 = vmatpush1.msra.mxu0 0.0
    %47 = vmatprep.subr.mxu0 0.0
    %48 = vmatpush1.msra.mxu0 0.0
    %49 = vmatprep.subr.mxu0 0.0
    %50 = vmatpush1.msra.mxu0 0.0
    %51 = vmatprep.subr.mxu0 0.0
    %52 = vmatpush1.msra.mxu0 0.0
    %53 = vmatprep.subr.mxu0 0.0
    %54 = vmatpush1.msra.mxu0 0.0
    %55 = vmatprep.subr.mxu0 0.0
    %56 = vmatpush1.msra.mxu0 0.0
    %57 = vmatprep.subr.mxu0 0.0
    %58 = vmatpush1.msra.mxu0 0.0
    %59 = vmatprep.subr.mxu0 0.0
    %60 = vmatpush1.msra.mxu0 0.0
    %61 = vmatprep.subr.mxu0 0.0
    %62 = vmatpush1.msra.mxu0 0.0
    %63 = vmatprep.subr.mxu0 0.0
    %64 = vmatpush1.msra.mxu0 0.0
    %65 = vmatprep.subr.mxu0 0.0
    %66 = vmatpush1.msra.mxu0 0.0
    %67 = vmatprep.subr.mxu0 0.0
    %68 = vmatpush1.msra.mxu0 0.0
    %69 = vmatprep.subr.mxu0 0.0
    %70 = vmatpush1.msra.mxu0 0.0
    %71 = vmatprep.subr.mxu0 0.0
    %72 = vmatpush1.msra.mxu0 0.0
    %73 = vmatprep.subr.mxu0 0.0
    %74 = vmatpush1.msra.mxu0 0.0
    %75 = vmatprep.subr.mxu0 0.0
    %76 = vmatpush1.msra.mxu0 0.0
    %77 = vmatprep.subr.mxu0 0.0
    %78 = vmatpush1.msra.mxu0 0.0
    %79 = vmatprep.subr.mxu0 0.0
    %80 = vmatpush1.msra.mxu0 0.0
    %81 = vmatprep.subr.mxu0 0.0
    %82 = vmatpush1.msra.mxu0 0.0
    %83 = vmatprep.subr.mxu0 0.0
    %84 = vmatpush1.msra.mxu0 0.0
    %85 = vmatprep.subr.mxu0 0.0
    %86 = vmatpush1.msra.mxu0 0.0
    %87 = vmatprep.subr.mxu0 0.0
    %88 = vmatpush1.msra.mxu0 0.0
    %89 = vmatprep.subr.mxu0 0.0
    %90 = vmatpush1.msra.mxu0 0.0
    %91 = vmatprep.subr.mxu0 0.0
    %92 = vmatpush1.msra.mxu0 0.0
    %93 = vmatprep.subr.mxu0 0.0
    %94 = vmatpush1.msra.mxu0 0.0
    %95 = vmatprep.subr.mxu0 0.0
    %96 = vmatpush1.msra.mxu0 0.0
    %97 = vmatprep.subr.mxu0 0.0
    %98 = vmatpush1.msra.mxu0 0.0
    %99 = vmatprep.subr.mxu0 0.0
    %100 = vmatpush1.msra.mxu0 0.0
    %101 = vmatprep.subr.mxu0 0.0
    %102 = vmatpush1.msra.mxu0 0.0
    %103 = vmatprep.subr.mxu0 0.0
    %104 = vmatpush1.msra.mxu0 0.0
    %105 = vmatprep.mubr.f32.mxu0 0.0
    %106 = vmatmul.mubr.f32.gmra.mrb[0].mxu0 %v39
    %v107 = vpop.f32.mrb[0].mxu0
    %v108 = vadd.f32 %v35, %v107
    %v109 = vpop.f32.mrb[0].mxu0
    %110 = vdwg.mxu0
    %v111 = vmax.f32 %v108, 0.0
    %v112 = vld [vmem:[#allocation2] sm:$0xff]
    %v113 = vld [vmem:[%s3] sm:$0xff]
    %v114 = vld [vmem:[%s3 + $0x8] sm:$0xff]
    %v115 = vld [vmem:[%s3 + $0x10] sm:$0xff]
    %v116 = vld [vmem:[%s3 + $0x18] sm:$0xff]
    %vm117 = vcmask 261120
    %v119 = vsel %vm117, %v111, 0
    %121 = vmatprep.subr.mxu0 0.0
    %122 = vmatpush1.msra.mxu0 %v113
    %123 = vmatprep.subr.mxu0 0.0
    %124 = vmatpush1.msra.mxu0 %v114
    %125 = vmatprep.subr.mxu0 0.0
    %126 = vmatpush1.msra.mxu0 %v115
    %127 = vmatprep.subr.mxu0 0.0
    %128 = vmatpush1.msra.mxu0 %v116
    %129 = vmatprep.subr.mxu0 0.0
    %130 = vmatpush1.msra.mxu0 0.0
    %131 = vmatprep.subr.mxu0 0.0
    %132 = vmatpush1.msra.mxu0 0.0
    %133 = vmatprep.subr.mxu0 0.0
    %134 = vmatpush1.msra.mxu0 0.0
    %135 = vmatprep.subr.mxu0 0.0
    %136 = vmatpush1.msra.mxu0 0.0
    %137 = vmatprep.subr.mxu0 0.0
    %138 = vmatpush1.msra.mxu0 0.0
    %139 = vmatprep.subr.mxu0 0.0
    %140 = vmatpush1.msra.mxu0 0.0
    %141 = vmatprep.subr.mxu0 0.0
    %142 = vmatpush1.msra.mxu0 0.0
    %143 = vmatprep.subr.mxu0 0.0
    %144 = vmatpush1.msra.mxu0 0.0
    %145 = vmatprep.subr.mxu0 0.0
    %146 = vmatpush1.msra.mxu0 0.0
    %147 = vmatprep.subr.mxu0 0.0
    %148 = vmatpush1.msra.mxu0 0.0
    %149 = vmatprep.subr.mxu0 0.0
    %150 = vmatpush1.msra.mxu0 0.0
    %151 = vmatprep.subr.mxu0 0.0
    %152 = vmatpush1.msra.mxu0 0.0
    %153 = vmatprep.subr.mxu0 0.0
    %154 = vmatpush1.msra.mxu0 0.0
    %155 = vmatprep.subr.mxu0 0.0
    %156 = vmatpush1.msra.mxu0 0.0
    %157 = vmatprep.subr.mxu0 0.0
    %158 = vmatpush1.msra.mxu0 0.0
    %159 = vmatprep.subr.mxu0 0.0
    %160 = vmatpush1.msra.mxu0 0.0
    %161 = vmatprep.subr.mxu0 0.0
    %162 = vmatpush1.msra.mxu0 0.0
    %163 = vmatprep.subr.mxu0 0.0
    %164 = vmatpush1.msra.mxu0 0.0
    %165 = vmatprep.subr.mxu0 0.0
    %166 = vmatpush1.msra.mxu0 0.0
    %167 = vmatprep.subr.mxu0 0.0
    %168 = vmatpush1.msra.mxu0 0.0
    %169 = vmatprep.subr.mxu0 0.0
    %170 = vmatpush1.msra.mxu0 0.0
    %171 = vmatprep.subr.mxu0 0.0
    %172 = vmatpush1.msra.mxu0 0.0
    %173 = vmatprep.subr.mxu0 0.0
    %174 = vmatpush1.msra.mxu0 0.0
    %175 = vmatprep.subr.mxu0 0.0
    %176 = vmatpush1.msra.mxu0 0.0
    %177 = vmatprep.subr.mxu0 0.0
    %178 = vmatpush1.msra.mxu0 0.0
    %179 = vmatprep.subr.mxu0 0.0
    %180 = vmatpush1.msra.mxu0 0.0
    %181 = vmatprep.subr.mxu0 0.0
    %182 = vmatpush1.msra.mxu0 0.0
    %183 = vmatprep.subr.mxu0 0.0
    %184 = vmatpush1.msra.mxu0 0.0
    %185 = vmatprep.mubr.f32.mxu0 0.0
    %186 = vmatmul.mubr.f32.gmra.mrb[0].mxu0 %v119
    %v187 = vpop.f32.mrb[0].mxu0
    %v188 = vadd.f32 0.0, %v187
    %v189 = vpop.f32.mrb[0].mxu0
    %190 = vdwg.mxu0
    %v191 = vadd.f32 %v112, %v188
    %vm192 = vcmask 64512
    %193 = vst.msk [vmem:[#allocation2] sm:$0xff] %vm192, %v191
    // Predicated region
    $region26: #{tpu_custom_call.1} parent=1 // pred_check
      %p194 = pneg %p21
    $region27: #{tpu_custom_call.1} parent=1 // pred_check_branch
      %196 = sbr.rel (%p194) target = $region29
    $region28: #{tpu_custom_call.1} parent=1 // pred_region
      %v197 = vld [vmem:[#allocation2] sm:$0xff]
      %v198 = vld [vmem:[%s4] sm:$0x1]
      %v200 = vlaneseq
      %v201 = vshrl.u32 %v200, 7
      %v202 = vsub.s32 0, %v201
      %v203 = vrot.slane %v198, %v202
      %v205 = vadd.f32 %v197, %v203
      %206 = vst.msk [vmem:[#allocation3] sm:$0xff] %vm192, %v205
    $region29: #{tpu_custom_call.1} parent=1 // pred_fallthru
      _
    // Predicated region
    $region30: #{tpu_custom_call.1} parent=1 // pred_check
      _
    $region31: #{tpu_custom_call.1} parent=1 // pred_check_branch
      %208 = sbr.rel (0) target = $region33
    $region32: #{tpu_custom_call.1} parent=1 // pred_region
      %s210 = ssub.s32 128, 128
      %211 = vsyncadd [#allocation4], %s210
      %s213 = sshll.u32 [#allocation3], 4
      %s214 = int_to_ptr.vmem [resolvable:$true] %s213
      %216 = dma.vmem_to_hbm [thread:$0]  %s214, 128, %s5, [#allocation4]
    $region33: #{tpu_custom_call.1} parent=1 // pred_fallthru
      _
    // Predicated region
    $region34: #{tpu_custom_call.1} parent=1 // pred_check
      _
    $region35: #{tpu_custom_call.1} parent=1 // pred_check_branch
      %218 = sbr.rel (0) target = $region37
    $region36: #{tpu_custom_call.1} parent=1 // pred_region
      %219 = dma.done [#allocation4], 128
    $region37: #{tpu_custom_call.1} parent=1 // pred_fallthru
      _
    %220 = vsyncpa [#allocation4], 1

</llo_original>
